<compile_context>
chip_gen: v6e
topology: v6e:2x2x1
jax: 0.10.0
libtpu: 0.0.40
codegen_flags: <defaults>
</compile_context>

<pallas_src>
import functools

import jax
import jax.numpy as jnp
from jax import lax
from jax.experimental import pallas as pl
from jax.experimental.pallas import tpu as pltpu

EPS = 1e-5  # PyTorch BatchNorm1d default eps
LANE = 128
SUBLANE = 8


def _residual_fc_kernel(*refs, real_b, tn, separate_lhs):
    """One output-feature tile: Linear + BatchNorm1d(batch stats) + ReLU + residual."""
    if separate_lhs:
        x_res_ref, x_mm_ref, w_ref, p_ref, o_ref = refs   # bf16 LHS passed separately
    else:
        x_res_ref, w_ref, p_ref, o_ref = refs             # f32 LHS doubles as residual
        x_mm_ref = x_res_ref

    j = pl.program_id(0)

    x_mm = x_mm_ref[...]                 # (B_pad, D_pad) matmul-dtype (grid-invariant)
    w = w_ref[...]                       # (D_pad, tn)   pre-transposed (in, out) layout
    bias = p_ref[0:1, :]                 # (1, tn)
    gamma = p_ref[1:2, :]                # (1, tn)
    beta = p_ref[2:3, :]                 # (1, tn)

    # Linear on the MXU: contraction dim is the leading dim of the weight tile
    # (MXU-native layout — no relayout of the weight inside the loop).
    h = jnp.dot(x_mm, w, preferred_element_type=jnp.float32) + bias   # (B_pad, tn) f32

    # BatchNorm1d over the batch dim (training mode, biased variance).  Padded batch
    # rows (rows >= real_b are zero-padding) are masked out of the statistics.
    b_pad = x_mm.shape[0]
    inv_n = 1.0 / real_b
    if real_b == b_pad:
        mean = jnp.sum(h, axis=0, keepdims=True) * inv_n
        diff = h - mean
    else:
        row_mask = (lax.broadcasted_iota(jnp.int32, (b_pad, 1), 0) < real_b)
        row_mask = row_mask.astype(jnp.float32)
        mean = jnp.sum(h * row_mask, axis=0, keepdims=True) * inv_n
        diff = (h - mean) * row_mask
    var = jnp.sum(diff * diff, axis=0, keepdims=True) * inv_n

    # Fold gamma into the rsqrt: one (1, tn) vector, saves a full-tile VPU multiply.
    scale = gamma * lax.rsqrt(var + EPS)
    act = jnp.maximum(diff * scale + beta, 0.0)

    # Residual add: slice this feature tile out of the (already resident) f32 x block.
    col0 = pl.multiple_of(j * tn, tn)
    o_ref[...] = x_res_ref[:, pl.ds(col0, tn)] + act


def _vmem_capacity_bytes():
    """Per-TensorCore VMEM capacity; conservative fallback = v7x (64 MiB)."""
    try:
        cap = getattr(pltpu.get_tpu_info(), "vmem_capacity_bytes", None)
        if cap:
            return int(cap)
    except Exception:
        pass
    return 64 << 20


def residual_fc(x, w, b, gamma, beta, *, use_bf16_matmul=True, tn=None):
    """x: (B, D) f32; w: (D_out, D_in) PyTorch layout (D_out == D_in); b/gamma/beta: (D,)."""
    x = jnp.asarray(x, jnp.float32)
    B, D = x.shape
    assert w.shape == (D, D), "ResidualFC residual add requires input_dim == output_dim"

    D_pad = ((D + LANE - 1) // LANE) * LANE
    B_pad = ((B + SUBLANE - 1) // SUBLANE) * SUBLANE
    mm_dtype = jnp.bfloat16 if use_bf16_matmul else jnp.float32
    mm_bytes = 2 if use_bf16_matmul else 4

    # ---- generation-aware VMEM budgeting -------------------------------------------
    vmem_cap = _vmem_capacity_bytes()          # 128 MiB on v5e/v6e, 64 MiB on v7x
    vmem_budget = (vmem_cap * 3) // 4          # leave headroom for Mosaic internal scratch

    def vmem_footprint(tile_n):
        resident = B_pad * D_pad * 4                       # f32 x (residual source)
        if use_bf16_matmul:
            resident += B_pad * D_pad * mm_bytes           # bf16 x copy (matmul LHS)
        resident += 2 * tile_n * D_pad * mm_bytes          # double-buffered weight tiles
        resident += 2 * SUBLANE * tile_n * 4               # double-buffered param tiles
        resident += 2 * B_pad * tile_n * 4                 # double-buffered output tiles
        return resident

    if tn is None:
        # Candidate feature-tile widths: multiples of 128 dividing D_pad; prefer >= 2
        # tiles when D_pad allows (so v7x's second TensorCore gets half the features).
        candidates = [t for t in range(LANE, D_pad + 1, LANE) if D_pad % t == 0]
        if D_pad >= 2 * LANE:
            candidates = [t for t in candidates if t <= D_pad // 2] or [LANE]
        tn = LANE
        for t in sorted(candidates):
            if vmem_footprint(t) <= (2 * vmem_budget) // 3:
                tn = t
    assert D_pad % tn == 0 and tn % LANE == 0
    n_tiles = D_pad // tn

    if vmem_footprint(tn) > vmem_budget:
        # TODO(synk): for very large GAN batches on v7x, tile the batch axis and compute
        # BN statistics in a two-pass (sum / sumsq accumulate) scheme instead of keeping
        # the whole x block resident.
        raise ValueError(
            f"ResidualFC kernel: resident footprint {vmem_footprint(tn)} B exceeds the "
            f"VMEM budget {vmem_budget} B; batch-tiled BN path not implemented.")

    # ---- host-side (wrapper) prep: pad once, cast once, transpose once --------------
    fresh_x = (B_pad != B) or (D_pad != D)
    x_p = jnp.pad(x, ((0, B_pad - B), (0, D_pad - D))) if fresh_x else x

    # Weight: cast to matmul dtype and pre-transpose to (in, out) so the kernel's
    # contraction dim is the leading dim of the weight tile (no in-kernel relayout).
    w_t = jnp.asarray(w, mm_dtype).T                       # (D_in, D_out)
    if D_pad != D:
        w_t = jnp.pad(w_t, ((0, D_pad - D), (0, D_pad - D)))

    # Pack bias / gamma / beta into one sublane-aligned (8, D_pad) tile -> single DMA.
    params = jnp.zeros((SUBLANE, D_pad), jnp.float32)
    params = params.at[0, :D].set(jnp.asarray(b, jnp.float32))
    params = params.at[1, :D].set(jnp.asarray(gamma, jnp.float32))
    params = params.at[2, :D].set(jnp.asarray(beta, jnp.float32))

    kernel = functools.partial(
        _residual_fc_kernel, real_b=B, tn=tn, separate_lhs=use_bf16_matmul)

    x_res_spec = pl.BlockSpec((B_pad, D_pad), lambda j: (0, 0))   # full x, batch un-tiled
    w_spec = pl.BlockSpec((D_pad, tn), lambda j: (0, j))          # weight tile (in, out)
    p_spec = pl.BlockSpec((SUBLANE, tn), lambda j: (0, j))        # packed params tile

    if use_bf16_matmul:
        # Grid-invariant bf16 copy of x: cast once in the wrapper (single XLA op), fetched
        # once into VMEM (constant index_map) — no per-grid-step repack on the VPU.
        x_mm_p = x_p.astype(jnp.bfloat16)
        in_specs = [x_res_spec, pl.BlockSpec((B_pad, D_pad), lambda j: (0, 0)), w_spec, p_spec]
        args = (x_p, x_mm_p, w_t, params)
        lhs_bytes = B_pad * D_pad * (4 + mm_bytes)
    else:
        in_specs = [x_res_spec, w_spec, p_spec]
        args = (x_p, w_t, params)
        lhs_bytes = B_pad * D_pad * 4

    vmem_limit = int(min(max(vmem_footprint(tn) * 5 // 4 + (1 << 20), 4 << 20), vmem_budget))
    compiler_params = pltpu.CompilerParams(
        dimension_semantics=("parallel",),
        vmem_limit_bytes=vmem_limit,
    )
    cost = pl.CostEstimate(
        flops=2 * B_pad * D_pad * D_pad + 8 * B_pad * D_pad,
        transcendentals=D_pad,
        bytes_accessed=(lhs_bytes                       # x reads
                        + D_pad * D_pad * mm_bytes      # weight read
                        + SUBLANE * D_pad * 4           # params read
                        + B_pad * D_pad * 4),           # output write
    )

    out_p = pl.pallas_call(
        kernel,
        out_shape=jax.ShapeDtypeStruct((B_pad, D_pad), jnp.float32),
        grid_spec=pltpu.PrefetchScalarGridSpec(
            num_scalar_prefetch=0,
            grid=(n_tiles,),
            in_specs=in_specs,
            out_specs=pl.BlockSpec((B_pad, tn), lambda j: (0, j)),
        ),
        compiler_params=compiler_params,
        cost_estimate=cost,
        # Alias the (freshly padded) f32-x buffer to the output.  Safe ONLY because the
        # x BlockSpec has a constant index_map (single prologue fetch) — see header note.
        input_output_aliases=({0: 0} if fresh_x else {}),
    )(*args)

    return out_p[:B, :D]


def residual_fc_ref(x, w, b, gamma, beta):
    """Pure-JAX reference matching PyTorch training-mode forward."""
    h = x @ w.T + b
    mean = jnp.mean(h, axis=0, keepdims=True)
    var = jnp.mean((h - mean) ** 2, axis=0, keepdims=True)
    hn = (h - mean) / jnp.sqrt(var + EPS)
    act = jnp.maximum(hn * gamma + beta, 0.0)
    return x + act


if __name__ == "__main__":
    key = jax.random.PRNGKey(0)
    B, D = 8, 32  # input_dim == output_dim == 32, batch of 8

    k_x, k_w, k_b = jax.random.split(key, 3)
    x = jax.random.normal(k_x, (B, D), dtype=jnp.float32)

    # PyTorch-style Linear init: uniform(-1/sqrt(in), 1/sqrt(in))
    bound = 1.0 / (D ** 0.5)
    w = jax.random.uniform(k_w, (D, D), minval=-bound, maxval=bound, dtype=jnp.float32)
    b = jax.random.uniform(k_b, (D,), minval=-bound, maxval=bound, dtype=jnp.float32)
    # BatchNorm1d affine params
    gamma = jnp.ones((D,), jnp.float32)
    beta = jnp.zeros((D,), jnp.float32)

    ref = residual_fc_ref(x, w, b, gamma, beta)

    # Default path: bf16 MXU operands, f32 accumulation + f32 BN/affine/residual.
    out = jax.block_until_ready(residual_fc(x, w, b, gamma, beta))
    assert out.shape == (B, D)
    assert jnp.allclose(out, ref, atol=5e-2, rtol=5e-2), "default (bf16 MXU) kernel mismatch"

    # Exact f32 MXU path.
    out_f32 = jax.block_until_ready(residual_fc(x, w, b, gamma, beta, use_bf16_matmul=False))
    assert jnp.allclose(out_f32, ref, atol=1e-4, rtol=1e-4), "f32 kernel mismatch vs reference"

    # Ragged batch (exercises the masked-BN-statistics path; B=5 padded to 8 rows).
    x5 = x[:5]
    ref5 = residual_fc_ref(x5, w, b, gamma, beta)
    out5 = jax.block_until_ready(residual_fc(x5, w, b, gamma, beta, use_bf16_matmul=False))
    assert jnp.allclose(out5, ref5, atol=1e-4, rtol=1e-4), "masked-batch kernel mismatch"
    out5_bf16 = jax.block_until_ready(residual_fc(x5, w, b, gamma, beta))
    assert jnp.allclose(out5_bf16, ref5, atol=5e-2, rtol=5e-2), "masked-batch bf16 kernel mismatch"

    print("KERNEL_OK")
</pallas_src>

<mosaic_0001>
module attributes {stable_mosaic.version = 11 : i64} {
  func.func @_residual_fc_kernel(%arg0: i32, %arg1: memref<8x128xf32, #tpu.memory_space<vmem>>, %arg2: memref<8x128xbf16, #tpu.memory_space<vmem>>, %arg3: memref<128x128xbf16, #tpu.memory_space<vmem>>, %arg4: memref<8x128xf32, #tpu.memory_space<vmem>>, %arg5: memref<8x128xf32, #tpu.memory_space<vmem>>) attributes {dimension_semantics = [#tpu.dimension_semantics<parallel>], iteration_bounds = array<i64: 1>, scalar_prefetch = 0 : i64, scratch_operands = 0 : i64, tpu.core_type = #tpu.core_type<tc>, window_params = [{pipeline_mode = #tpu.pipeline_mode<synchronous>, transform_indices = @transform_0, window_bounds = array<i64: 8, 128>}, {pipeline_mode = #tpu.pipeline_mode<synchronous>, transform_indices = @transform_1, window_bounds = array<i64: 8, 128>}, {transform_indices = @transform_2, window_bounds = array<i64: 128, 128>}, {transform_indices = @transform_3, window_bounds = array<i64: 8, 128>}, {transform_indices = @transform_4, window_bounds = array<i64: 8, 128>}]} {
    %c0 = arith.constant 0 : index
    %c0_0 = arith.constant 0 : index
    %0 = vector.load %arg2[%c0, %c0_0] : memref<8x128xbf16, #tpu.memory_space<vmem>>, vector<8x128xbf16>
    %c0_1 = arith.constant 0 : index
    %c0_2 = arith.constant 0 : index
    %1 = vector.load %arg3[%c0_1, %c0_2] : memref<128x128xbf16, #tpu.memory_space<vmem>>, vector<128x128xbf16>
    %c0_3 = arith.constant 0 : index
    %c0_4 = arith.constant 0 : index
    %2 = vector.load %arg4[%c0_3, %c0_4] : memref<8x128xf32, #tpu.memory_space<vmem>>, vector<1x128xf32>
    %c1 = arith.constant 1 : index
    %c0_5 = arith.constant 0 : index
    %3 = vector.load %arg4[%c1, %c0_5] : memref<8x128xf32, #tpu.memory_space<vmem>>, vector<1x128xf32>
    %c2 = arith.constant 2 : index
    %c0_6 = arith.constant 0 : index
    %4 = vector.load %arg4[%c2, %c0_6] : memref<8x128xf32, #tpu.memory_space<vmem>>, vector<1x128xf32>
    %cst = arith.constant dense<0.000000e+00> : vector<8x128xf32>
    %5 = tpu.matmul %0, %1, %cst {dimension_numbers = #tpu.dot_dimension_numbers<[1], [0], [0], [1], [0, 0, 1, 1], [], []>} : vector<8x128xbf16>, vector<128x128xbf16>, vector<8x128xf32> -> vector<8x128xf32>
    %6 = vector.broadcast %2 : vector<1x128xf32> to vector<8x128xf32>
    %7 = arith.addf %5, %6 : vector<8x128xf32>
    %cst_7 = arith.constant dense<0.000000e+00> : vector<128xf32>
    %8 = vector.multi_reduction <add>, %7, %cst_7 [0] : vector<8x128xf32> to vector<128xf32>
    %9 = vector.shape_cast %8 : vector<128xf32> to vector<1x128xf32>
    %cst_8 = arith.constant 1.250000e-01 : f32
    %10 = vector.broadcast %cst_8 : f32 to vector<1x128xf32>
    %11 = arith.mulf %9, %10 : vector<1x128xf32>
    %12 = vector.broadcast %11 : vector<1x128xf32> to vector<8x128xf32>
    %13 = arith.subf %7, %12 : vector<8x128xf32>
    %14 = arith.mulf %13, %13 : vector<8x128xf32>
    %cst_9 = arith.constant dense<0.000000e+00> : vector<128xf32>
    %15 = vector.multi_reduction <add>, %14, %cst_9 [0] : vector<8x128xf32> to vector<128xf32>
    %16 = vector.shape_cast %15 : vector<128xf32> to vector<1x128xf32>
    %cst_10 = arith.constant 1.250000e-01 : f32
    %17 = vector.broadcast %cst_10 : f32 to vector<1x128xf32>
    %18 = arith.mulf %16, %17 : vector<1x128xf32>
    %cst_11 = arith.constant 9.99999974E-6 : f32
    %19 = vector.broadcast %cst_11 : f32 to vector<1x128xf32>
    %20 = arith.addf %18, %19 : vector<1x128xf32>
    %21 = math.rsqrt %20 : vector<1x128xf32>
    %22 = arith.mulf %3, %21 : vector<1x128xf32>
    %23 = vector.broadcast %22 : vector<1x128xf32> to vector<8x128xf32>
    %24 = arith.mulf %13, %23 : vector<8x128xf32>
    %25 = vector.broadcast %4 : vector<1x128xf32> to vector<8x128xf32>
    %26 = arith.addf %24, %25 : vector<8x128xf32>
    %cst_12 = arith.constant 0.000000e+00 : f32
    %27 = vector.broadcast %cst_12 : f32 to vector<8x128xf32>
    %28 = arith.maximumf %26, %27 : vector<8x128xf32>
    %c128_i32 = arith.constant 128 : i32
    %29 = arith.muli %arg0, %c128_i32 : i32
    %30 = tpu.assume_multiple %29, 128 : i32
    %c0_13 = arith.constant 0 : index
    %31 = arith.index_cast %30 : i32 to index
    %32 = vector.load %arg1[%c0_13, %31] : memref<8x128xf32, #tpu.memory_space<vmem>>, vector<8x128xf32>
    %33 = arith.addf %32, %28 : vector<8x128xf32>
    %c0_14 = arith.constant 0 : index
    %c0_15 = arith.constant 0 : index
    %34 = vector.load %arg5[%c0_14, %c0_15] : memref<8x128xf32, #tpu.memory_space<vmem>>, vector<8x128xf32>
    tpu.vector_store %arg5[%c0_14, %c0_15], %33 {strides = array<i32>} : memref<8x128xf32, #tpu.memory_space<vmem>>, vector<8x128xf32>,
    return
  }
  func.func @transform_0(%arg0: i32) -> (i32, i32) {
    %c0_i32 = arith.constant 0 : i32
    %c0_i32_0 = arith.constant 0 : i32
    %c0_i32_1 = arith.constant 0 : i32
    return %c0_i32, %c0_i32_0 : i32, i32
  }
  func.func @transform_1(%arg0: i32) -> (i32, i32) {
    %c0_i32 = arith.constant 0 : i32
    %c0_i32_0 = arith.constant 0 : i32
    %c0_i32_1 = arith.constant 0 : i32
    return %c0_i32, %c0_i32_0 : i32, i32
  }
  func.func @transform_2(%arg0: i32) -> (i32, i32) {
    %c0_i32 = arith.constant 0 : i32
    %c0_i32_0 = arith.constant 0 : i32
    return %c0_i32, %arg0 : i32, i32
  }
  func.func @transform_3(%arg0: i32) -> (i32, i32) {
    %c0_i32 = arith.constant 0 : i32
    %c0_i32_0 = arith.constant 0 : i32
    return %c0_i32, %arg0 : i32, i32
  }
  func.func @transform_4(%arg0: i32) -> (i32, i32) {
    %c0_i32 = arith.constant 0 : i32
    %c0_i32_0 = arith.constant 0 : i32
    return %c0_i32, %arg0 : i32, i32
  }
}

</mosaic_0001>

<llo_original>
// kernel: tpu_custom_call.1
$region0: #{tpu_custom_call.1}
  #allocation0 [shape = 'u32[]', space=smem, size = 0x4, offset = 0x4, fixed_abs, tag = 'smem constant byte address 0x4 - core index']
  #allocation1 [shape = 'u32[144,128]{1,0:T(1,128)}', space=vmem, size = 0x12000, scoped, tag = 'internal scratch']
  %s0 = inlined_call_operand.hbm [shape: f32[8,128], index: 0, kind: input, shape index: {}, may-alias: {0,4}]
  %s1 = inlined_call_operand.vmem [shape: bf16[8,128], index: 1, kind: input, shape index: {}]
  %s2 = inlined_call_operand.hbm [shape: bf16[128,128], index: 2, kind: input, shape index: {}]
  %s3 = inlined_call_operand.vmem [shape: f32[8,128], index: 3, kind: input, shape index: {}]
  %s4 = inlined_call_operand.hbm [shape: f32[8,128], index: 4, kind: output, shape index: {}, may-alias: {0,4}]
  %s5 = sld [smem:[#allocation0]]
  $region34: #{tpu_custom_call.1} parent=0
    _
  %s7 = ssub.s32 1, %s5
  %s8 = scalar_select 0, %s7, %s5
  $region1: #{tpu_custom_call.1} parent=0
    #allocation2 [shape = 'u8[4096]{0}', space=vmem, size = 0x1000, scoped, tag = 'input window, operand 0, single buffered']
    #allocation3 [shape = 's32[1]{0}', space=sflag, size = 0x4, scoped, tag = 'scoped memory for tpu_custom_call.1']
    #allocation4 [shape = 's32[1]{0}', space=sflag, size = 0x4, scoped, tag = 'scoped memory for tpu_custom_call.1']
    #allocation5 [shape = 'u8[32768]{0}', space=vmem, size = 0x8000, scoped, tag = 'input window, operand 2, single buffered']
    #allocation6 [shape = 's32[1]{0}', space=sflag, size = 0x4, scoped, tag = 'scoped memory for tpu_custom_call.1']
    #allocation7 [shape = 'u8[4096]{0}', space=vmem, size = 0x1000, scoped, tag = 'output window, operand 0, single buffered']
    %9 = vsyncpa [#allocation3], 0
    %10 = vsyncpa [#allocation6], 0
    %11 = vsyncpa [#allocation4], 0
    // Predicated region
    $region2: #{tpu_custom_call.1} parent=1 // pred_check
      _
    $region3: #{tpu_custom_call.1} parent=1 // pred_check_branch
      %13 = sbr.rel (0) target = $region5
    $region4: #{tpu_custom_call.1} parent=1 // pred_region
      %s15 = ssub.s32 128, 128
      %16 = vsyncadd [#allocation3], %s15
      %s18 = sshll.u32 [#allocation2], 4
      %s19 = int_to_ptr.vmem [resolvable:$true] %s18
      %21 = dma.hbm_to_vmem [thread:$0]  %s0, 128, %s19, [#allocation3]
    $region5: #{tpu_custom_call.1} parent=1 // pred_fallthru
      _
    // Predicated region
    $region6: #{tpu_custom_call.1} parent=1 // pred_check
      _
    $region7: #{tpu_custom_call.1} parent=1 // pred_check_branch
      %23 = sbr.rel (0) target = $region9
    $region8: #{tpu_custom_call.1} parent=1 // pred_region
      _
    $region9: #{tpu_custom_call.1} parent=1 // pred_fallthru
      _
    // Predicated region
    $region10: #{tpu_custom_call.1} parent=1 // pred_check
      _
    $region11: #{tpu_custom_call.1} parent=1 // pred_check_branch
      %25 = sbr.rel (0) target = $region13
    $region12: #{tpu_custom_call.1} parent=1 // pred_region
      %s27 = ssub.s32 1024, 1024
      %28 = vsyncadd [#allocation6], %s27
      %s29 = sshll.u32 [#allocation5], 4
      %s30 = int_to_ptr.vmem [resolvable:$true] %s29
      %35 = dma.hbm_to_vmem [thread:$0]  %s2, 1024, %s30, [#allocation6], 64, 64, 4
    $region13: #{tpu_custom_call.1} parent=1 // pred_fallthru
      _
    // Predicated region
    $region14: #{tpu_custom_call.1} parent=1 // pred_check
      _
    $region15: #{tpu_custom_call.1} parent=1 // pred_check_branch
      %37 = sbr.rel (0) target = $region17
    $region16: #{tpu_custom_call.1} parent=1 // pred_region
      _
    $region17: #{tpu_custom_call.1} parent=1 // pred_fallthru
      _
    // Predicated region
    $region18: #{tpu_custom_call.1} parent=1 // pred_check
      _
    $region19: #{tpu_custom_call.1} parent=1 // pred_check_branch
      %39 = sbr.rel (0) target = $region21
    $region20: #{tpu_custom_call.1} parent=1 // pred_region
      %40 = dma.done [#allocation3], 128
    $region21: #{tpu_custom_call.1} parent=1 // pred_fallthru
      _
    // Predicated region
    $region22: #{tpu_custom_call.1} parent=1 // pred_check
      _
    $region23: #{tpu_custom_call.1} parent=1 // pred_check_branch
      %42 = sbr.rel (0) target = $region25
    $region24: #{tpu_custom_call.1} parent=1 // pred_region
      %43 = dma.done [#allocation6], 1024
    $region25: #{tpu_custom_call.1} parent=1 // pred_fallthru
      _
    %v45 = vld [vmem:[%s1] sm:$0xf]
    %v46 = vld [vmem:[#allocation5] sm:$0xf]
    %v47 = vld [vmem:[#allocation5 + $0x4] sm:$0xf]
    %v48 = vld [vmem:[#allocation5 + $0x8] sm:$0xf]
    %v49 = vld [vmem:[#allocation5 + $0xc] sm:$0xf]
    %v50 = vld [vmem:[#allocation5 + $0x10] sm:$0xf]
    %v51 = vld [vmem:[#allocation5 + $0x14] sm:$0xf]
    %v52 = vld [vmem:[#allocation5 + $0x18] sm:$0xf]
    %v53 = vld [vmem:[#allocation5 + $0x1c] sm:$0xf]
    %v54 = vld [vmem:[#allocation5 + $0x20] sm:$0xf]
    %v55 = vld [vmem:[#allocation5 + $0x24] sm:$0xf]
    %v56 = vld [vmem:[#allocation5 + $0x28] sm:$0xf]
    %v57 = vld [vmem:[#allocation5 + $0x2c] sm:$0xf]
    %v58 = vld [vmem:[#allocation5 + $0x30] sm:$0xf]
    %v59 = vld [vmem:[#allocation5 + $0x34] sm:$0xf]
    %v60 = vld [vmem:[#allocation5 + $0x38] sm:$0xf]
    %v61 = vld [vmem:[#allocation5 + $0x3c] sm:$0xf]
    %v62 = vld [vmem:[%s3] sm:$0x1]
    %v63 = vld [vmem:[%s3 + $0x1] sm:$0x1]
    %v64 = vld [vmem:[%s3 + $0x2] sm:$0x1]
    %v65 = vlaneseq
    %v66 = vshrl.u32 %v65, 7
    %v67 = vsub.s32 0, %v66
    %v68 = vrot.slane %v62, %v67
    %v85 = vunpack.c.l.b16 %v46
    %v86 = vunpack.c.l.b16 %v47
    %v87 = vunpack.c.l.b16 %v48
    %v88 = vunpack.c.l.b16 %v49
    %v89 = vunpack.c.l.b16 %v50
    %v90 = vunpack.c.l.b16 %v51
    %v91 = vunpack.c.l.b16 %v52
    %v92 = vunpack.c.l.b16 %v53
    %v93 = vunpack.c.l.b16 %v54
    %v94 = vunpack.c.l.b16 %v55
    %v95 = vunpack.c.l.b16 %v56
    %v96 = vunpack.c.l.b16 %v57
    %v97 = vunpack.c.l.b16 %v58
    %v98 = vunpack.c.l.b16 %v59
    %v99 = vunpack.c.l.b16 %v60
    %v100 = vunpack.c.l.b16 %v61
    %v101 = vpack.c.b16 %v86, %v85
    %v102 = vpack.c.b16 %v88, %v87
    %v103 = vpack.c.b16 %v90, %v89
    %v104 = vpack.c.b16 %v92, %v91
    %v105 = vpack.c.b16 %v94, %v93
    %v106 = vpack.c.b16 %v96, %v95
    %v107 = vpack.c.b16 %v98, %v97
    %v108 = vpack.c.b16 %v100, %v99
    %117 = vmatprep.subr.bf16.mxu0 0
    %118 = vmatpush1.bf16.msra.mxu0 %v108
    %119 = vmatprep.subr.bf16.mxu0 0
    %120 = vmatpush1.bf16.msra.mxu0 %v107
    %121 = vmatprep.subr.bf16.mxu0 0
    %122 = vmatpush1.bf16.msra.mxu0 %v106
    %123 = vmatprep.subr.bf16.mxu0 0
    %124 = vmatpush1.bf16.msra.mxu0 %v105
    %125 = vmatprep.subr.bf16.mxu0 0
    %126 = vmatpush1.bf16.msra.mxu0 %v104
    %127 = vmatprep.subr.bf16.mxu0 0
    %128 = vmatpush1.bf16.msra.mxu0 %v103
    %129 = vmatprep.subr.bf16.mxu0 0
    %130 = vmatpush1.bf16.msra.mxu0 %v102
    %131 = vmatprep.subr.bf16.mxu0 0
    %132 = vmatpush1.bf16.msra.mxu0 %v101
    %133 = vmatprep.subr.bf16.mxu0 0
    %134 = vmatpush2.bf16.msra.mxu0 0
    %135 = vmatprep.subr.bf16.mxu0 0
    %136 = vmatpush2.bf16.msra.mxu0 0
    %137 = vmatprep.subr.bf16.mxu0 0
    %138 = vmatpush2.bf16.msra.mxu0 0
    %139 = vmatprep.subr.bf16.mxu0 0
    %140 = vmatpush2.bf16.msra.mxu0 0
    %141 = vmatprep.subr.bf16.mxu0 0
    %142 = vmatpush2.bf16.msra.mxu0 0
    %143 = vmatprep.subr.bf16.mxu0 0
    %144 = vmatpush2.bf16.msra.mxu0 0
    %145 = vmatprep.subr.bf16.mxu0 0
    %146 = vmatpush2.bf16.msra.mxu0 0
    %147 = vmatprep.subr.bf16.mxu0 0
    %148 = vmatpush2.bf16.msra.mxu0 0
    %149 = vmatprep.mubr.bf16.mxu0 0
    %150 = vmatmul.mubr.bf16.gmra.mxu0 %v45
    %v151 = vpop.f32.mrf.mxu0
    %v152 = vadd.f32 %v68, %v151
    %v153 = vpop.f32.mrf.mxu0
    %v154 = vpop.f32.mrf.mxu0
    %v155 = vpop.f32.mrf.mxu0
    %156 = vdwg.mxu0
    %v157 = vrot.slane %v152, 4
    %v158 = vadd.f32 %v152, %v157
    %v159 = vrot.slane %v158, 2
    %v160 = vadd.f32 %v158, %v159
    %v161 = vrot.slane %v160, 1
    %v162 = vadd.f32 %v160, %v161
    %v163 = vmul.f32 %v162, 0.125
    %v164 = vsub.f32 %v152, %v163
    %v165 = vmul.f32 %v164, %v164
    %v166 = vrot.slane %v165, 4
    %v167 = vadd.f32 %v165, %v166
    %v168 = vrot.slane %v167, 2
    %v169 = vadd.f32 %v167, %v168
    %v170 = vrot.slane %v169, 1
    %v171 = vadd.f32 %v169, %v170
    %v172 = vmul.f32 %v171, 0.125
    %v173 = vadd.f32 %v172, 1e-05
    %v174 = vrsqrt.pop %v173
    %v175 = vmul.f32 %v63, %v174
    %v176 = vlaneseq
    %v177 = vshrl.u32 %v176, 7
    %v178 = vsub.s32 0, %v177
    %v179 = vrot.slane %v175, %v178
    %v180 = vmul.f32 %v164, %v179
    %v181 = vlaneseq
    %v182 = vshrl.u32 %v181, 7
    %v183 = vsub.s32 0, %v182
    %v184 = vrot.slane %v64, %v183
    %v185 = vadd.f32 %v180, %v184
    %v186 = vmax.f32 %v185, 0.0
    %s187 = smul.u32 0, 128
    %s188 = sshra.s32 %s187, 7
    %s189 = sand.u32 %s187, 127
    %s190 = scalar_lea.vmem [#allocation2], %s188
    %v191 = vld [vmem:[%s190] sm:$0xff]
    %v192 = vadd.f32 %v191, %v186
    %193 = vst [vmem:[#allocation7] sm:$0xff] %v192
    // Predicated region
    $region26: #{tpu_custom_call.1} parent=1 // pred_check
      _
    $region27: #{tpu_custom_call.1} parent=1 // pred_check_branch
      %195 = sbr.rel (0) target = $region29
    $region28: #{tpu_custom_call.1} parent=1 // pred_region
      %s197 = ssub.s32 128, 128
      %198 = vsyncadd [#allocation4], %s197
      %s200 = sshll.u32 [#allocation7], 4
      %s201 = int_to_ptr.vmem [resolvable:$true] %s200
      %203 = dma.vmem_to_hbm [thread:$0]  %s201, 128, %s4, [#allocation4]
    $region29: #{tpu_custom_call.1} parent=1 // pred_fallthru
      _
    // Predicated region
    $region30: #{tpu_custom_call.1} parent=1 // pred_check
      _
    $region31: #{tpu_custom_call.1} parent=1 // pred_check_branch
      %205 = sbr.rel (0) target = $region33
    $region32: #{tpu_custom_call.1} parent=1 // pred_region
      %206 = dma.done [#allocation4], 128
    $region33: #{tpu_custom_call.1} parent=1 // pred_fallthru
      _
    %207 = vsyncpa [#allocation3], 1
    %208 = vsyncpa [#allocation6], 1
    %209 = vsyncpa [#allocation4], 1

</llo_original>
